<compile_context>
chip_gen: v5e
topology: v5e:2x2
jax: 0.10.0
libtpu: 0.0.40
codegen_flags: <defaults>
</compile_context>

<pallas_src>
import functools

import jax
import jax.numpy as jnp
from jax.experimental import pallas as pl
from jax.experimental.pallas import tpu as pltpu

LANES = 128            # vreg lane dim
SUBL = 8               # vreg sublane dim (f32)
MAX_TILE_ROWS = 4096   # 4096*128*4B = 2 MiB per f32 input block
STRIP_ROWS = 256       # in-kernel strip: bounds live ranges of the fused chain
NUM_SPLITS = 2         # leading "parallel" grid axis (dual TensorCore on v7x)


def _round_up(x, m):
    return ((x + m - 1) // m) * m


def _log_sigmoid(x):
    # numerically stable log(sigmoid(x)) = min(x, 0) - log1p(exp(-|x|))
    return jnp.minimum(x, 0.0) - jnp.log1p(jnp.exp(-jnp.abs(x)))


def _int_pow(base, g):
    # positive-integer power by squaring: pure VPU multiplies, keeps the EUP
    # free for the two log-sigmoids.
    result = None
    acc = base
    while g:
        if g & 1:
            result = acc if result is None else result * acc
        g >>= 1
        if g:
            acc = acc * acc
    return result


def _focal_elementwise(p, y, gamma):
    """fl = -(1-p)**g * logsigmoid(p) * y - p**g * logsigmoid(1-p) * (1-y).

    `gamma` must be a static Python number (it selects a trace-time branch).
    """
    ls_p = _log_sigmoid(p)
    ls_1mp = _log_sigmoid(1.0 - p)
    if gamma == 0:
        # x**0 == 1 in torch even for non-positive x; algebraically one less mul.
        return y * (ls_1mp - ls_p) - ls_1mp
    if float(gamma) == int(gamma) and gamma > 0:
        w_pos = _int_pow(1.0 - p, int(gamma))   # (1-p)**gamma
        w_neg = _int_pow(p, int(gamma))         # p**gamma
    else:
        w_pos = (1.0 - p) ** gamma              # fractional gamma: torch `**`
        w_neg = p ** gamma
    return -w_pos * ls_p * y - w_neg * ls_1mp * (1.0 - y)


def _focal_kernel(p_ref, y_ref, o_ref, *, gamma, rows, tile_rows, strip,
                  blocks_per_split, total_blocks, has_phantom, ragged_last):
    i = pl.program_id(0)        # parallel split (dual-TC on v7x)
    j = pl.program_id(1)        # sequential reduction axis
    b = i * blocks_per_split + j

    # Output block index depends only on `i`, so this (8,128) block stays
    # resident in VMEM across the whole j loop and acts as the accumulator.
    @pl.when(j == 0)
    def _():
        o_ref[...] = jnp.zeros_like(o_ref)

    def partial_sum(masked):
        nstrips = tile_rows // strip
        row0 = b * tile_rows

        def body(s, acc):
            off = s * strip
            if not isinstance(off, int):
                off = pl.multiple_of(off, strip)
            # Native-dtype DMA already brought the block in; cast per strip on
            # the VPU so intermediates stay vreg-scale, not block-scale.
            p = p_ref[pl.ds(off, strip), :].astype(jnp.float32)
            y = y_ref[pl.ds(off, strip), :].astype(jnp.float32)
            fl = _focal_elementwise(p, y, gamma)
            if masked:
                # Only the ragged last block pays for this. Block-edge rows
                # beyond `rows` contain garbage (possibly NaN/Inf); select to
                # zero BEFORE the sum so nothing leaks.
                rid = row0 + off + jax.lax.broadcasted_iota(
                    jnp.int32, (strip, LANES), 0)
                fl = jnp.where(rid < rows, fl, 0.0)
            return acc + fl.reshape(strip // SUBL, SUBL, LANES).sum(axis=0)

        init = jnp.zeros((SUBL, LANES), jnp.float32)
        if nstrips == 1:
            return body(0, init)
        return jax.lax.fori_loop(0, nstrips, body, init, unroll=2)

    if not has_phantom and not ragged_last:
        # Hot path: every block is full and real -> no mask, no gating.
        o_ref[...] += partial_sum(masked=False)
    else:
        last = total_blocks - 1

        @pl.when(b < last)
        def _():
            o_ref[...] += partial_sum(masked=False)

        # b > last are phantom blocks (odd block count over 2 splits): skipped.
        @pl.when(b == last)
        def _():
            o_ref[...] += partial_sum(masked=ragged_last)


def focal_loss(inp, target, gamma=0, *, max_tile_rows=MAX_TILE_ROWS):
    """Pallas TPU FocalLoss.forward. `gamma` must be static. Returns f32 scalar."""
    p = jnp.ravel(inp)
    y = jnp.ravel(target)
    n = p.shape[0]
    if n == 0:
        return jnp.float32(jnp.nan)   # torch: mean over empty -> nan

    # ---- layout: flat -> (rows, 128) with at most a <128-element pad --------
    pad = (-n) % LANES
    if pad:
        # Tiny tail pad only (never a full-array-sized block pad); the padded
        # zeros' exact contribution is subtracted below.
        p = jnp.pad(p, (0, pad))
        y = jnp.pad(y, (0, pad))
    rows = (n + pad) // LANES
    p2 = p.reshape(rows, LANES)    # free (bitcast) reshape
    y2 = y.reshape(rows, LANES)

    # ---- tiling --------------------------------------------------------------
    def _pack(dt):                 # sublane packing factor of the native dtype
        return max(1, 4 // jnp.dtype(dt).itemsize)
    row_align = SUBL * max(_pack(p2.dtype), _pack(y2.dtype))

    per_split = pl.cdiv(rows, NUM_SPLITS)
    if per_split <= STRIP_ROWS:
        tile_rows = min(_round_up(per_split, row_align),
                        _round_up(max(max_tile_rows, 1), row_align))
        strip = tile_rows
    else:
        tile_rows = min(_round_up(per_split, STRIP_ROWS),
                        max(_round_up(max_tile_rows, STRIP_ROWS), STRIP_ROWS))
        strip = STRIP_ROWS

    total_blocks = pl.cdiv(rows, tile_rows)
    num_splits = min(NUM_SPLITS, total_blocks)
    blocks_per_split = pl.cdiv(total_blocks, num_splits)
    has_phantom = blocks_per_split * num_splits > total_blocks
    ragged_last = (rows % tile_rows) != 0

    kernel = functools.partial(
        _focal_kernel, gamma=gamma, rows=rows, tile_rows=tile_rows, strip=strip,
        blocks_per_split=blocks_per_split, total_blocks=total_blocks,
        has_phantom=has_phantom, ragged_last=ragged_last)

    if has_phantom:
        def in_map(i, j):          # clamp phantom steps onto the last real block
            return (jnp.minimum(i * blocks_per_split + j, total_blocks - 1), 0)
    else:
        def in_map(i, j):
            return (i * blocks_per_split + j, 0)

    partials = pl.pallas_call(
        kernel,
        out_shape=jax.ShapeDtypeStruct((num_splits * SUBL, LANES), jnp.float32),
        grid_spec=pltpu.PrefetchScalarGridSpec(
            num_scalar_prefetch=0,
            grid=(num_splits, blocks_per_split),
            in_specs=[pl.BlockSpec((tile_rows, LANES), in_map),
                      pl.BlockSpec((tile_rows, LANES), in_map)],
            out_specs=pl.BlockSpec((SUBL, LANES), lambda i, j: (i, 0)),
        ),
        compiler_params=pltpu.CompilerParams(
            dimension_semantics=("parallel", "arbitrary")),
    )(p2, y2)

    total = jnp.sum(partials)
    if pad:
        # Exact correction for the zero-padded tail: 0 for gamma > 0,
        # softplus(-1) per padded element for gamma == 0.
        total = total - jnp.float32(pad) * _focal_elementwise(
            jnp.float32(0.0), jnp.float32(0.0), gamma)
    return total / jnp.float32(n)


def _reference(inp, target, gamma=0):
    p = jnp.ravel(inp).astype(jnp.float32)
    y = jnp.ravel(target).astype(jnp.float32)
    ls_p = jax.nn.log_sigmoid(p)
    ls_1mp = jax.nn.log_sigmoid(1.0 - p)
    fl = -((1.0 - p) ** gamma) * ls_p * y - (p ** gamma) * ls_1mp * (1.0 - y)
    return jnp.mean(fl)


if __name__ == "__main__":
    key = jax.random.PRNGKey(0)
    ks = jax.random.split(key, 12)

    # NCHW dense-prediction logits / soft targets (aligned -> zero-copy path).
    x = jax.random.normal(ks[0], (2, 4, 16, 16), dtype=jnp.float32)
    t = jax.random.uniform(ks[1], (2, 4, 16, 16), dtype=jnp.float32)
    # Ragged numel (not a multiple of 128): tail pad + correction + masked block.
    xr = jax.random.normal(ks[2], (3, 5, 9, 11), dtype=jnp.float32)
    tr = jax.random.uniform(ks[3], (3, 5, 9, 11), dtype=jnp.float32)
    # bf16 logits with f32 targets: native-dtype DMA + in-kernel cast.
    xb = jax.random.normal(ks[4], (2, 4, 16, 16), dtype=jnp.bfloat16)
    tb = jax.random.uniform(ks[5], (2, 4, 16, 16), dtype=jnp.float32)
    # Odd block count with a small tile cap: phantom-block / clamped-index path.
    xo = jax.random.normal(ks[6], (2, 4, 16, 24), dtype=jnp.float32)
    to = jax.random.uniform(ks[7], (2, 4, 16, 24), dtype=jnp.float32)
    # Larger map: exercises the multi-strip fori_loop path (masked + unmasked).
    xl = jax.random.normal(ks[8], (8, 8, 32, 36), dtype=jnp.float32)
    tl = jax.random.uniform(ks[9], (8, 8, 32, 36), dtype=jnp.float32)

    cases = [
        (x, t, 0, {}),
        (x, t, 2, {}),
        (xr, tr, 0, {}),
        (xr, tr, 2, {}),
        (xb, tb, 2, {}),
        (xo, to, 0, {"max_tile_rows": 8}),
        (xl, tl, 2, {}),
    ]
    for a, b, g, kw in cases:
        got = jax.block_until_ready(focal_loss(a, b, gamma=g, **kw))
        want = jax.block_until_ready(_reference(a, b, gamma=g))
        assert jnp.allclose(got, want, rtol=1e-5, atol=1e-5), (g, got, want)

    print("KERNEL_OK")
</pallas_src>

<mosaic_0001>
module attributes {stable_mosaic.version = 11 : i64} {
  func.func @_focal_kernel(%arg0: i32, %arg1: i32, %arg2: memref<8x128xf32, #tpu.memory_space<vmem>>, %arg3: memref<8x128xf32, #tpu.memory_space<vmem>>, %arg4: memref<8x128xf32, #tpu.memory_space<vmem>>) attributes {dimension_semantics = [#tpu.dimension_semantics<parallel>, #tpu.dimension_semantics<arbitrary>], iteration_bounds = array<i64: 2, 1>, scalar_prefetch = 0 : i64, scratch_operands = 0 : i64, tpu.core_type = #tpu.core_type<tc>, window_params = [{transform_indices = @transform_0, window_bounds = array<i64: 8, 128>}, {transform_indices = @transform_1, window_bounds = array<i64: 8, 128>}, {transform_indices = @transform_2, window_bounds = array<i64: 8, 128>}]} {
    %c0_i32 = arith.constant 0 : i32
    %0 = arith.cmpi eq, %arg1, %c0_i32 : i32
    %1 = arith.extui %0 : i1 to i32
    %c0_i32_0 = arith.constant 0 : i32
    %2 = arith.cmpi ne, %1, %c0_i32_0 : i32
    scf.if %2 {
      %cst_14 = arith.constant 0.000000e+00 : f32
      %33 = vector.broadcast %cst_14 : f32 to vector<8x128xf32>
      %c0_15 = arith.constant 0 : index
      %c0_16 = arith.constant 0 : index
      %34 = vector.load %arg4[%c0_15, %c0_16] : memref<8x128xf32, #tpu.memory_space<vmem>>, vector<8x128xf32>
      tpu.vector_store %arg4[%c0_15, %c0_16], %33 {strides = array<i32>} : memref<8x128xf32, #tpu.memory_space<vmem>>, vector<8x128xf32>,
    } else {
    }
    %c0 = arith.constant 0 : index
    %c0_1 = arith.constant 0 : index
    %3 = vector.load %arg4[%c0, %c0_1] : memref<8x128xf32, #tpu.memory_space<vmem>>, vector<8x128xf32>
    %cst = arith.constant 0.000000e+00 : f32
    %4 = vector.broadcast %cst : f32 to vector<8x128xf32>
    %c0_2 = arith.constant 0 : index
    %c0_3 = arith.constant 0 : index
    %5 = vector.load %arg2[%c0_2, %c0_3] : memref<8x128xf32, #tpu.memory_space<vmem>>, vector<8x128xf32>
    %c0_4 = arith.constant 0 : index
    %c0_5 = arith.constant 0 : index
    %6 = vector.load %arg3[%c0_4, %c0_5] : memref<8x128xf32, #tpu.memory_space<vmem>>, vector<8x128xf32>
    %cst_6 = arith.constant 0.000000e+00 : f32
    %7 = vector.broadcast %cst_6 : f32 to vector<8x128xf32>
    %8 = arith.minimumf %5, %7 : vector<8x128xf32>
    %9 = math.absf %5 : vector<8x128xf32>
    %cst_7 = arith.constant 0.000000e+00 : f32
    %10 = vector.broadcast %cst_7 : f32 to vector<8x128xf32>
    %11 = arith.subf %10, %9 : vector<8x128xf32>
    %12 = math.exp %11 : vector<8x128xf32>
    %13 = math.log1p %12 : vector<8x128xf32>
    %14 = arith.subf %8, %13 : vector<8x128xf32>
    %cst_8 = arith.constant 1.000000e+00 : f32
    %15 = vector.broadcast %cst_8 : f32 to vector<8x128xf32>
    %16 = arith.subf %15, %5 : vector<8x128xf32>
    %cst_9 = arith.constant 0.000000e+00 : f32
    %17 = vector.broadcast %cst_9 : f32 to vector<8x128xf32>
    %18 = arith.minimumf %16, %17 : vector<8x128xf32>
    %19 = math.absf %16 : vector<8x128xf32>
    %cst_10 = arith.constant 0.000000e+00 : f32
    %20 = vector.broadcast %cst_10 : f32 to vector<8x128xf32>
    %21 = arith.subf %20, %19 : vector<8x128xf32>
    %22 = math.exp %21 : vector<8x128xf32>
    %23 = math.log1p %22 : vector<8x128xf32>
    %24 = arith.subf %18, %23 : vector<8x128xf32>
    %25 = arith.subf %24, %14 : vector<8x128xf32>
    %26 = arith.mulf %6, %25 : vector<8x128xf32>
    %27 = arith.subf %26, %24 : vector<8x128xf32>
    %28 = vector.shape_cast %27 : vector<8x128xf32> to vector<1x8x128xf32>
    %cst_11 = arith.constant dense<0.000000e+00> : vector<8x128xf32>
    %29 = vector.multi_reduction <add>, %28, %cst_11 [0] : vector<1x8x128xf32> to vector<8x128xf32>
    %30 = arith.addf %4, %29 : vector<8x128xf32>
    %31 = arith.addf %3, %30 : vector<8x128xf32>
    %c0_12 = arith.constant 0 : index
    %c0_13 = arith.constant 0 : index
    %32 = vector.load %arg4[%c0_12, %c0_13] : memref<8x128xf32, #tpu.memory_space<vmem>>, vector<8x128xf32>
    tpu.vector_store %arg4[%c0_12, %c0_13], %31 {strides = array<i32>} : memref<8x128xf32, #tpu.memory_space<vmem>>, vector<8x128xf32>,
    return
  }
  func.func @transform_0(%arg0: i32, %arg1: i32) -> (i32, i32) {
    %c1_i32 = arith.constant 1 : i32
    %0 = arith.muli %arg0, %c1_i32 : i32
    %1 = arith.addi %0, %arg1 : i32
    %c0_i32 = arith.constant 0 : i32
    %c0_i32_0 = arith.constant 0 : i32
    return %1, %c0_i32 : i32, i32
  }
  func.func @transform_1(%arg0: i32, %arg1: i32) -> (i32, i32) {
    %c1_i32 = arith.constant 1 : i32
    %0 = arith.muli %arg0, %c1_i32 : i32
    %1 = arith.addi %0, %arg1 : i32
    %c0_i32 = arith.constant 0 : i32
    %c0_i32_0 = arith.constant 0 : i32
    return %1, %c0_i32 : i32, i32
  }
  func.func @transform_2(%arg0: i32, %arg1: i32) -> (i32, i32) {
    %c0_i32 = arith.constant 0 : i32
    %c0_i32_0 = arith.constant 0 : i32
    return %arg0, %c0_i32 : i32, i32
  }
}

</mosaic_0001>

<llo_original>
// kernel: tpu_custom_call.1
$region0: #{tpu_custom_call.1}
  #allocation0 [shape = 'u32[]', space=smem, size = 0x4, offset = 0x4, fixed_abs, tag = 'smem constant byte address 0x4 - core index']
  #allocation1 [shape = 'u32[72,128]{1,0:T(1,128)}', space=vmem, size = 0x9000, scoped, tag = 'internal scratch']
  %s0 = inlined_call_operand.hbm [shape: f32[16,128], index: 0, kind: input, shape index: {}]
  %s1 = inlined_call_operand.hbm [shape: f32[16,128], index: 1, kind: input, shape index: {}]
  %s2 = inlined_call_operand.hbm [shape: f32[16,128], index: 2, kind: output, shape index: {}]
  %s3 = sld [smem:[#allocation0]]
  $region53: #{tpu_custom_call.1} parent=0
    _
  %s5 = ssub.s32 1, %s3
  %s6 = scalar_select 0, %s5, %s3
  $region1: #{tpu_custom_call.1} parent=0
    #allocation2 [shape = 'u8[8192]{0}', space=vmem, size = 0x2000, scoped, tag = 'input window, operand 0']
    #allocation3 [shape = 's32[2]{0}', space=sflag, size = 0x8, scoped, tag = 'scoped memory for tpu_custom_call.1']
    #allocation4 [shape = 's32[2]{0}', space=sflag, size = 0x8, scoped, tag = 'scoped memory for tpu_custom_call.1']
    #allocation5 [shape = 'u8[8192]{0}', space=vmem, size = 0x2000, scoped, tag = 'input window, operand 1']
    #allocation6 [shape = 's32[2]{0}', space=sflag, size = 0x8, scoped, tag = 'scoped memory for tpu_custom_call.1']
    #allocation7 [shape = 'u8[8192]{0}', space=vmem, size = 0x2000, scoped, tag = 'output window, operand 0']
    %7 = vsyncpa [#allocation3], 0
    %s8 = scalar_lea.sflag [#allocation3], 1
    %9 = vsyncpa %s8, 0
    %10 = vsyncpa [#allocation6], 0
    %s11 = scalar_lea.sflag [#allocation6], 1
    %12 = vsyncpa %s11, 0
    %13 = vsyncpa [#allocation4], 0
    %s14 = scalar_lea.sflag [#allocation4], 1
    %15 = vsyncpa %s14, 0
    loop: start=0, step=1, limit=4
    $region2: #{tpu_custom_call.1} parent=1 // loop_pre_header
      _
    $region3: #{tpu_custom_call.1} parent=1 // loop_header
      %s17 = sphi 0, %s21
      %p18 = scmp.ge.s32.totalorder %s17, 4
      %s24 = sphi 0, %s36
      %s25 = sphi 0, %s32
      %s26 = sphi 0, %s24
      %s27 = sphi 0, %s25
      %s28 = sphi 0, %s26
      %s29 = sphi 0, %s27
      %s41 = sphi 0, %s43
      %s44 = sphi 0, %s41
      %s45 = sphi 0, %s44
      %s61 = sphi 0, %s45
      %s69 = sphi 0, %s71
      %s72 = sphi 0, %s69
      %s73 = sphi 0, %s72
      %s89 = sphi 0, %s73
      %s95 = sphi 0, %s97
      %s98 = sphi 0, %s95
      %s99 = sphi 0, %s98
      %s115 = sphi 0, %s99
    $region4: #{tpu_custom_call.1} parent=1 // loop_header_branch
      %20 = sbr.rel (%p18) target = $region8
    $region5: #{tpu_custom_call.1} parent=1 // loop_body
      %s22 = ssub.s32 %s17, 1
      %s23 = ssub.s32 %s17, 2
      %s30 = sadd.s32 1, %s25
      %p31 = scmp.ge.s32.totalorder %s30, 1
      %s32 = scalar_select %p31, 0, %s30
      %s33 = sadd.s32 1, %s24
      %s34 = scalar_select %p31, %s33, %s24
      %p35 = scmp.ge.s32.totalorder %s34, 2
      %s36 = scalar_select %p35, 0, %s34
      %s37 = sadd.s32 %s24, %s25
      %s38 = sadd.s32 %s36, %s32
      %s39 = ssub.s32 %s37, %s38
      %p40 = scmp.eq.s32.totalorder %s39, 0
      %s42 = sadd.s32 %s41, 1
      %s43 = scalar_select %p40, %s41, %s42
      %p46 = pneg %p40
      %p47 = scmp.eq.s32.totalorder %s17, 1
      %p48 = por %p46, %p47
      %p49 = scmp.ne.s32.totalorder %s41, %s44
      %p50 = scmp.eq.s32.totalorder %s17, 0
      %p51 = por %p49, %p50
      %p52 = scmp.ne.s32.totalorder %s41, %s44
      %p53 = scmp.eq.s32.totalorder %s22, 1
      %p54 = por %p52, %p53
      %p55 = scmp.ne.s32.totalorder %s44, %s45
      %p56 = scmp.eq.s32.totalorder %s22, 0
      %p57 = por %p55, %p56
      %p58 = scmp.ne.s32.totalorder %s44, %s45
      %p59 = scmp.eq.s32.totalorder %s23, 1
      %p60 = por %p58, %p59
      %p62 = scmp.ne.s32.totalorder %s45, %s61
      %p63 = scmp.eq.s32.totalorder %s23, 0
      %p64 = por %p62, %p63
      %s65 = sadd.s32 %s24, %s25
      %s66 = sadd.s32 %s36, %s32
      %s67 = ssub.s32 %s65, %s66
      %p68 = scmp.eq.s32.totalorder %s67, 0
      %s70 = sadd.s32 %s69, 1
      %s71 = scalar_select %p68, %s69, %s70
      %p74 = pneg %p68
      %p75 = scmp.eq.s32.totalorder %s17, 1
      %p76 = por %p74, %p75
      %p77 = scmp.ne.s32.totalorder %s69, %s72
      %p78 = scmp.eq.s32.totalorder %s17, 0
      %p79 = por %p77, %p78
      %p80 = scmp.ne.s32.totalorder %s69, %s72
      %p81 = scmp.eq.s32.totalorder %s22, 1
      %p82 = por %p80, %p81
      %p83 = scmp.ne.s32.totalorder %s72, %s73
      %p84 = scmp.eq.s32.totalorder %s22, 0
      %p85 = por %p83, %p84
      %p86 = scmp.ne.s32.totalorder %s72, %s73
      %p87 = scmp.eq.s32.totalorder %s23, 1
      %p88 = por %p86, %p87
      %p90 = scmp.ne.s32.totalorder %s73, %s89
      %p91 = scmp.eq.s32.totalorder %s23, 0
      %p92 = por %p90, %p91
      %s93 = ssub.s32 %s24, %s36
      %p94 = scmp.eq.s32.totalorder %s93, 0
      %s96 = sadd.s32 %s95, 1
      %s97 = scalar_select %p94, %s95, %s96
      %p100 = pneg %p94
      %p101 = scmp.eq.s32.totalorder %s17, 1
      %p102 = por %p100, %p101
      %p103 = scmp.ne.s32.totalorder %s95, %s98
      %p104 = scmp.eq.s32.totalorder %s17, 0
      %p105 = por %p103, %p104
      %p106 = scmp.ne.s32.totalorder %s95, %s98
      %p107 = scmp.eq.s32.totalorder %s22, 1
      %p108 = por %p106, %p107
      %p109 = scmp.ne.s32.totalorder %s98, %s99
      %p110 = scmp.eq.s32.totalorder %s22, 0
      %p111 = por %p109, %p110
      %p112 = scmp.ne.s32.totalorder %s98, %s99
      %p113 = scmp.eq.s32.totalorder %s23, 1
      %p114 = por %p112, %p113
      %p116 = scmp.ne.s32.totalorder %s99, %s115
      %p117 = scmp.eq.s32.totalorder %s23, 0
      %p118 = por %p116, %p117
      %p119 = scmp.le.s32.totalorder 1, %s17
      %p120 = scmp.lt.s32.totalorder %s17, 3
      %p121 = pnand %p119, %p120
      %p122 = pneg %p121
      // Predicated region
      $region9: #{tpu_custom_call.1} parent=5 // pred_check
        _
      $region10: #{tpu_custom_call.1} parent=5 // pred_check_branch
        %124 = sbr.rel (%p121) target = $region12
      $region11: #{tpu_custom_call.1} parent=5 // pred_region
        %s125 = ssub.s32 %s17, 1
      $region12: #{tpu_custom_call.1} parent=5 // pred_fallthru
        _
      %p126 = scmp.lt.s32.totalorder %s17, 2
      // Predicated region
      $region13: #{tpu_custom_call.1} parent=5 // pred_check
        %p127 = pneg %p126
      $region14: #{tpu_custom_call.1} parent=5 // pred_check_branch
        %129 = sbr.rel (%p127) target = $region16
      $region15: #{tpu_custom_call.1} parent=5 // pred_region
        // Predicated region
        $region17: #{tpu_custom_call.1} parent=15 // pred_check
          %p130 = pneg %p51
        $region18: #{tpu_custom_call.1} parent=15 // pred_check_branch
          %132 = sbr.rel (%p130) target = $region20
        $region19: #{tpu_custom_call.1} parent=15 // pred_region
          %s133 = sand.u32 %s41, 1
          %s134 = scalar_lea.sflag [#allocation3], %s133
          %s135 = sand.u32 %s41, 1
          %s136 = smul.addr %s135, 8
          %s137 = scalar_lea.vmem [#allocation2], %s136
          %s138 = sadd.s32 %s24, %s25
          %140 = vsyncadd %s134, 0
          %s141 = smul.addr %s138, 8
          %s142 = scalar_lea.hbm %s0, %s141
          %s144 = sshll.u32 %s142, 4
          %s145 = int_to_ptr.hbm [resolvable:$true] %s144
          %s146 = sshll.u32 %s137, 4
          %s147 = int_to_ptr.vmem [resolvable:$true] %s146
          %149 = dma.hbm_to_vmem [thread:$0]  %s145, 128, %s147, %s134
        $region20: #{tpu_custom_call.1} parent=15 // pred_fallthru
          _
        // Predicated region
        $region21: #{tpu_custom_call.1} parent=15 // pred_check
          %p150 = pneg %p79
        $region22: #{tpu_custom_call.1} parent=15 // pred_check_branch
          %152 = sbr.rel (%p150) target = $region24
        $region23: #{tpu_custom_call.1} parent=15 // pred_region
          %s153 = sand.u32 %s69, 1
          %s154 = scalar_lea.sflag [#allocation6], %s153
          %s155 = sand.u32 %s69, 1
          %s156 = smul.addr %s155, 8
          %s157 = scalar_lea.vmem [#allocation5], %s156
          %s158 = sadd.s32 %s24, %s25
          %160 = vsyncadd %s154, 0
          %s161 = smul.addr %s158, 8
          %s162 = scalar_lea.hbm %s1, %s161
          %s164 = sshll.u32 %s162, 4
          %s165 = int_to_ptr.hbm [resolvable:$true] %s164
          %s166 = sshll.u32 %s157, 4
          %s167 = int_to_ptr.vmem [resolvable:$true] %s166
          %169 = dma.hbm_to_vmem [thread:$0]  %s165, 128, %s167, %s154
        $region24: #{tpu_custom_call.1} parent=15 // pred_fallthru
          _
      $region16: #{tpu_custom_call.1} parent=5 // pred_fallthru
        _
      %p170 = scmp.le.s32.totalorder 1, %s17
      %p171 = scmp.lt.s32.totalorder %s17, 3
      %p172 = pnand %p170, %p171
      %p173 = pneg %p172
      // Predicated region
      $region25: #{tpu_custom_call.1} parent=5 // pred_check
        _
      $region26: #{tpu_custom_call.1} parent=5 // pred_check_branch
        %175 = sbr.rel (%p172) target = $region28
      $region27: #{tpu_custom_call.1} parent=5 // pred_region
        %s176 = ssub.s32 %s17, 1
        %s177 = sand.u32 %s44, 1
        %s178 = scalar_lea.sflag [#allocation3], %s177
        %s179 = sand.u32 %s44, 1
        %s180 = smul.addr %s179, 8
        %s181 = scalar_lea.vmem [#allocation2], %s180
        // Predicated region
        $region29: #{tpu_custom_call.1} parent=27 // pred_check
          %p182 = pneg %p57
        $region30: #{tpu_custom_call.1} parent=27 // pred_check_branch
          %184 = sbr.rel (%p182) target = $region32
        $region31: #{tpu_custom_call.1} parent=27 // pred_region
          %186 = dma.done %s178, 128
        $region32: #{tpu_custom_call.1} parent=27 // pred_fallthru
          _
        %s187 = sand.u32 %s72, 1
        %s188 = scalar_lea.sflag [#allocation6], %s187
        %s189 = sand.u32 %s72, 1
        %s190 = smul.addr %s189, 8
        %s191 = scalar_lea.vmem [#allocation5], %s190
        // Predicated region
        $region33: #{tpu_custom_call.1} parent=27 // pred_check
          %p192 = pneg %p85
        $region34: #{tpu_custom_call.1} parent=27 // pred_check_branch
          %194 = sbr.rel (%p192) target = $region36
        $region35: #{tpu_custom_call.1} parent=27 // pred_region
          %196 = dma.done %s188, 128
        $region36: #{tpu_custom_call.1} parent=27 // pred_fallthru
          _
        %s197 = sand.u32 %s44, 1
        %s198 = scalar_lea.sflag [#allocation3], %s197
        %s199 = sand.u32 %s44, 1
        %s200 = smul.addr %s199, 8
        %s201 = scalar_lea.vmem [#allocation2], %s200
        %p202 = pneg %p57
        %p203 = pneg %p54
        %s204 = sand.u32 %s72, 1
        %s205 = scalar_lea.sflag [#allocation6], %s204
        %s206 = sand.u32 %s72, 1
        %s207 = smul.addr %s206, 8
        %s208 = scalar_lea.vmem [#allocation5], %s207
        %p209 = pneg %p85
        %p210 = pneg %p82
        %p211 = pneg %p111
        %p212 = pneg %p108
        %s213 = sand.u32 %s98, 1
        %s214 = scalar_lea.sflag [#allocation4], %s213
        %s215 = sand.u32 %s98, 1
        %s216 = smul.addr %s215, 8
        %s217 = scalar_lea.vmem [#allocation7], %s216
        %s218 = sadd.s32 %s26, %s27
        %s219 = sadd.s32 %s26, %s27
        %p220 = scmp.eq.s32.totalorder %s27, 0
        // Predicated region
        $region37: #{tpu_custom_call.1} parent=27 // pred_check
          %p221 = pneg %p220
        $region38: #{tpu_custom_call.1} parent=27 // pred_check_branch
          %223 = sbr.rel (%p221) target = $region40
        $region39: #{tpu_custom_call.1} parent=27 // pred_region
          %224 = vst [vmem:[%s217] sm:$0xff] 0.0
        $region40: #{tpu_custom_call.1} parent=27 // pred_fallthru
          _
        %v225 = vld [vmem:[%s217] sm:$0xff]
        %v226 = vld [vmem:[%s181] sm:$0xff]
        %v227 = vld [vmem:[%s191] sm:$0xff]
        %v228 = vmin.f32 %v226, 0.0
        %v229 = vand.u32 2147483647, %v226
        %v230 = vsub.f32 0.0, %v229
        %v231 = vmul.f32 %v230, 1.442695
        %v232 = vpow.pop %v231
        %v233 = vadd.f32 %v232, 1.0
        %v234 = vlog2.pop %v233
        %v235 = vmul.f32 %v234, 0.6931472
        %v236 = vmul.f32 -0.5, %v232
        %v237 = vadd.f32 %v236, 1.0
        %v238 = vmul.f32 %v237, %v232
        %v239 = vand.u32 2147483647, %v232
        %vm240 = vcmp.lt.f32.partialorder %v239, 0.0004427343
        %v241 = vsel %vm240, %v238, %v235
        %v242 = vsub.f32 %v228, %v241
        %v243 = vsub.f32 1.0, %v226
        %v244 = vmin.f32 %v243, 0.0
        %v245 = vand.u32 2147483647, %v243
        %v246 = vsub.f32 0.0, %v245
        %v247 = vmul.f32 %v246, 1.442695
        %v248 = vpow.pop %v247
        %v249 = vadd.f32 %v248, 1.0
        %v250 = vlog2.pop %v249
        %v251 = vmul.f32 %v250, 0.6931472
        %v252 = vmul.f32 -0.5, %v248
        %v253 = vadd.f32 %v252, 1.0
        %v254 = vmul.f32 %v253, %v248
        %v255 = vand.u32 2147483647, %v248
        %vm256 = vcmp.lt.f32.partialorder %v255, 0.0004427343
        %v257 = vsel %vm256, %v254, %v251
        %v258 = vsub.f32 %v244, %v257
        %v259 = vsub.f32 %v258, %v242
        %v260 = vmul.f32 %v227, %v259
        %v261 = vsub.f32 %v260, %v258
        %v262 = vadd.f32 %v261, 0.0
        %v263 = vadd.f32 %v262, 0.0
        %v264 = vadd.f32 %v225, %v263
        %265 = vst [vmem:[%s217] sm:$0xff] %v264
        %s266 = sand.u32 %s98, 1
        %s267 = scalar_lea.sflag [#allocation4], %s266
        %s268 = sand.u32 %s98, 1
        %s269 = smul.addr %s268, 8
        %s270 = scalar_lea.vmem [#allocation7], %s269
        // Predicated region
        $region41: #{tpu_custom_call.1} parent=27 // pred_check
          %p271 = pneg %p108
        $region42: #{tpu_custom_call.1} parent=27 // pred_check_branch
          %273 = sbr.rel (%p271) target = $region44
        $region43: #{tpu_custom_call.1} parent=27 // pred_region
          %275 = vsyncadd %s267, 0
          %s276 = smul.addr %s26, 8
          %s277 = scalar_lea.hbm %s2, %s276
          %s279 = sshll.u32 %s270, 4
          %s280 = int_to_ptr.vmem [resolvable:$true] %s279
          %s281 = sshll.u32 %s277, 4
          %s282 = int_to_ptr.hbm [resolvable:$true] %s281
          %284 = dma.vmem_to_hbm [thread:$0]  %s280, 128, %s282, %s267
        $region44: #{tpu_custom_call.1} parent=27 // pred_fallthru
          _
      $region28: #{tpu_custom_call.1} parent=5 // pred_fallthru
        _
      %p285 = scmp.le.s32.totalorder 2, %s17
      // Predicated region
      $region45: #{tpu_custom_call.1} parent=5 // pred_check
        %p286 = pneg %p285
      $region46: #{tpu_custom_call.1} parent=5 // pred_check_branch
        %288 = sbr.rel (%p286) target = $region48
      $region47: #{tpu_custom_call.1} parent=5 // pred_region
        %s289 = ssub.s32 %s17, 2
        // Predicated region
        $region49: #{tpu_custom_call.1} parent=47 // pred_check
          %p290 = pneg %p114
        $region50: #{tpu_custom_call.1} parent=47 // pred_check_branch
          %292 = sbr.rel (%p290) target = $region52
        $region51: #{tpu_custom_call.1} parent=47 // pred_region
          %s293 = sand.u32 %s99, 1
          %s294 = scalar_lea.sflag [#allocation4], %s293
          %s295 = sand.u32 %s99, 1
          %s296 = smul.addr %s295, 8
          %s297 = scalar_lea.vmem [#allocation7], %s296
          %299 = dma.done %s294, 128
        $region52: #{tpu_custom_call.1} parent=47 // pred_fallthru
          _
      $region48: #{tpu_custom_call.1} parent=5 // pred_fallthru
        _
    $region6: #{tpu_custom_call.1} parent=1 // loop_footer
      %s21 = sadd.s32 1, %s17
    $region7: #{tpu_custom_call.1} parent=1 // loop_footer_branch
      %16 = sbr.rel target = $region3
    $region8: #{tpu_custom_call.1} parent=1 // loop_exit
      _
    %300 = vsyncpa [#allocation3], 1
    %s301 = scalar_lea.sflag [#allocation3], 1
    %302 = vsyncpa %s301, 1
    %303 = vsyncpa [#allocation6], 1
    %s304 = scalar_lea.sflag [#allocation6], 1
    %305 = vsyncpa %s304, 1
    %306 = vsyncpa [#allocation4], 1
    %s307 = scalar_lea.sflag [#allocation4], 1
    %308 = vsyncpa %s307, 1

</llo_original>
